<compile_context>
chip_gen: v5e
topology: v5e:2x2
jax: 0.10.0
libtpu: 0.0.40
codegen_flags: <defaults>
</compile_context>

<pallas_src>
import jax
import jax.numpy as jnp
from jax.experimental import pallas as pl
from jax.experimental.pallas import tpu as pltpu


def _patch_applier_kernel(img_ref, patch_ref, mask_ref, out_ref):
    # out = img + patch * (mask - img)   (== img*(1-patch) + patch*mask)
    img = img_ref[...]
    out_ref[...] = img + patch_ref[...] * (mask_ref[...] - img)


def patch_applier(img_batch, patch, patch_mask_tf):
    """img_batch, patch, patch_mask_tf: same-shape NCHW float arrays."""
    assert img_batch.shape == patch.shape == patch_mask_tf.shape
    orig_shape = img_batch.shape
    dtype = img_batch.dtype
    total = img_batch.size
    itemsize = jnp.dtype(dtype).itemsize

    LANES = 128
    # dtype-aware sublane packing: 8 for 32-bit, 16 for 16-bit, 32 for 8-bit
    sublane_pack = 8 * max(1, 4 // itemsize)

    # ~2 MiB per block -> 4 arrays x 2 buffers = ~16 MiB resident (fits all gens)
    target_rows = (2 * 1024 * 1024) // (LANES * itemsize)
    target_rows = max(sublane_pack, (target_rows // sublane_pack) * sublane_pack)

    rows = pl.cdiv(total, LANES)
    rows_rounded = ((rows + sublane_pack - 1) // sublane_pack) * sublane_pack
    tile_rows = min(target_rows, rows_rounded)

    grid_len = pl.cdiv(rows, tile_rows)
    padded_rows = grid_len * tile_rows
    padded_total = padded_rows * LANES

    def to_slab(x):
        flat = x.reshape(-1)
        if padded_total != total:
            flat = jnp.pad(flat, (0, padded_total - total))
        return flat.reshape(padded_rows, LANES)

    img2d = to_slab(img_batch)
    patch2d = to_slab(patch)
    mask2d = to_slab(patch_mask_tf)

    spec = pl.BlockSpec((tile_rows, LANES), lambda i: (i, 0))

    cost = pl.CostEstimate(
        flops=3 * padded_total,
        transcendentals=0,
        bytes_accessed=4 * padded_total * itemsize,  # 3 reads + 1 write
    )

    out2d = pl.pallas_call(
        _patch_applier_kernel,
        out_shape=jax.ShapeDtypeStruct((padded_rows, LANES), dtype),
        grid=(grid_len,),
        in_specs=[spec, spec, spec],
        out_specs=spec,
        compiler_params=pltpu.CompilerParams(
            dimension_semantics=("parallel",),
            vmem_limit_bytes=32 * 1024 * 1024,
        ),
        cost_estimate=cost,
    )(img2d, patch2d, mask2d)

    out_flat = out2d.reshape(-1)
    if padded_total != total:
        out_flat = out_flat[:total]
    return out_flat.reshape(orig_shape)


if __name__ == "__main__":
    key = jax.random.PRNGKey(0)
    k1, k2, k3, k4, k5, k6 = jax.random.split(key, 6)

    # Small NCHW shapes consistent with the module's elementwise forward.
    B, C, H, W = 2, 4, 16, 16
    img_batch = jax.random.uniform(k1, (B, C, H, W), dtype=jnp.float32)
    patch = jax.random.uniform(k2, (B, C, H, W), dtype=jnp.float32)
    patch_mask_tf = (jax.random.uniform(k3, (B, C, H, W)) > 0.5).astype(jnp.float32)

    out = patch_applier(img_batch, patch, patch_mask_tf)
    jax.block_until_ready(out)

    ref = img_batch * (1.0 - patch) + patch * patch_mask_tf
    assert out.shape == (B, C, H, W)
    assert jnp.allclose(out, ref, atol=1e-6), "mismatch vs reference"

    # Exercise the padding path (total not divisible by 128, rows not by 8).
    shp = (2, 3, 17, 19)
    img2 = jax.random.uniform(k4, shp, dtype=jnp.float32)
    patch2 = jax.random.uniform(k5, shp, dtype=jnp.float32)
    mask2 = (jax.random.uniform(k6, shp) > 0.5).astype(jnp.float32)
    out2 = patch_applier(img2, patch2, mask2)
    jax.block_until_ready(out2)
    ref2 = img2 * (1.0 - patch2) + patch2 * mask2
    assert out2.shape == shp
    assert jnp.allclose(out2, ref2, atol=1e-6), "mismatch vs reference (padded path)"

    print("KERNEL_OK")
</pallas_src>

<mosaic_0001>
module attributes {stable_mosaic.version = 11 : i64} {
  func.func @_patch_applier_kernel(%arg0: i32, %arg1: memref<16x128xf32, #tpu.memory_space<vmem>>, %arg2: memref<16x128xf32, #tpu.memory_space<vmem>>, %arg3: memref<16x128xf32, #tpu.memory_space<vmem>>, %arg4: memref<16x128xf32, #tpu.memory_space<vmem>>) attributes {dimension_semantics = [#tpu.dimension_semantics<parallel>], iteration_bounds = array<i64: 1>, scalar_prefetch = 0 : i64, scratch_operands = 0 : i64, tpu.core_type = #tpu.core_type<tc>, window_params = [{transform_indices = @transform_0, window_bounds = array<i64: 16, 128>}, {transform_indices = @transform_1, window_bounds = array<i64: 16, 128>}, {transform_indices = @transform_2, window_bounds = array<i64: 16, 128>}, {transform_indices = @transform_3, window_bounds = array<i64: 16, 128>}]} {
    %c0 = arith.constant 0 : index
    %c0_0 = arith.constant 0 : index
    %0 = vector.load %arg1[%c0, %c0_0] : memref<16x128xf32, #tpu.memory_space<vmem>>, vector<16x128xf32>
    %c0_1 = arith.constant 0 : index
    %c0_2 = arith.constant 0 : index
    %1 = vector.load %arg2[%c0_1, %c0_2] : memref<16x128xf32, #tpu.memory_space<vmem>>, vector<16x128xf32>
    %c0_3 = arith.constant 0 : index
    %c0_4 = arith.constant 0 : index
    %2 = vector.load %arg3[%c0_3, %c0_4] : memref<16x128xf32, #tpu.memory_space<vmem>>, vector<16x128xf32>
    %3 = arith.subf %2, %0 : vector<16x128xf32>
    %4 = arith.mulf %1, %3 : vector<16x128xf32>
    %5 = arith.addf %0, %4 : vector<16x128xf32>
    %c0_5 = arith.constant 0 : index
    %c0_6 = arith.constant 0 : index
    %6 = vector.load %arg4[%c0_5, %c0_6] : memref<16x128xf32, #tpu.memory_space<vmem>>, vector<16x128xf32>
    tpu.vector_store %arg4[%c0_5, %c0_6], %5 {strides = array<i32>} : memref<16x128xf32, #tpu.memory_space<vmem>>, vector<16x128xf32>,
    return
  }
  func.func @transform_0(%arg0: i32) -> (i32, i32) {
    %c0_i32 = arith.constant 0 : i32
    %c0_i32_0 = arith.constant 0 : i32
    return %arg0, %c0_i32 : i32, i32
  }
  func.func @transform_1(%arg0: i32) -> (i32, i32) {
    %c0_i32 = arith.constant 0 : i32
    %c0_i32_0 = arith.constant 0 : i32
    return %arg0, %c0_i32 : i32, i32
  }
  func.func @transform_2(%arg0: i32) -> (i32, i32) {
    %c0_i32 = arith.constant 0 : i32
    %c0_i32_0 = arith.constant 0 : i32
    return %arg0, %c0_i32 : i32, i32
  }
  func.func @transform_3(%arg0: i32) -> (i32, i32) {
    %c0_i32 = arith.constant 0 : i32
    %c0_i32_0 = arith.constant 0 : i32
    return %arg0, %c0_i32 : i32, i32
  }
}

</mosaic_0001>

<llo_original>
// kernel: tpu_custom_call.1
$region0: #{tpu_custom_call.1}
  #allocation0 [shape = 'u32[]', space=smem, size = 0x4, offset = 0x4, fixed_abs, tag = 'smem constant byte address 0x4 - core index']
  #allocation1 [shape = 'u32[72,128]{1,0:T(1,128)}', space=vmem, size = 0x9000, scoped, tag = 'internal scratch']
  %s0 = inlined_call_operand.hbm [shape: f32[16,128], index: 0, kind: input, shape index: {}]
  %s1 = inlined_call_operand.hbm [shape: f32[16,128], index: 1, kind: input, shape index: {}]
  %s2 = inlined_call_operand.hbm [shape: f32[16,128], index: 2, kind: input, shape index: {}]
  %s3 = inlined_call_operand.hbm [shape: f32[16,128], index: 3, kind: output, shape index: {}]
  %s4 = sld [smem:[#allocation0]]
  $region34: #{tpu_custom_call.1} parent=0
    _
  %s6 = ssub.s32 1, %s4
  %s7 = scalar_select 0, %s6, %s4
  $region1: #{tpu_custom_call.1} parent=0
    #allocation2 [shape = 'u8[8192]{0}', space=vmem, size = 0x2000, scoped, tag = 'input window, operand 0, single buffered']
    #allocation3 [shape = 's32[1]{0}', space=sflag, size = 0x4, scoped, tag = 'scoped memory for tpu_custom_call.1']
    #allocation4 [shape = 's32[1]{0}', space=sflag, size = 0x4, scoped, tag = 'scoped memory for tpu_custom_call.1']
    #allocation5 [shape = 'u8[8192]{0}', space=vmem, size = 0x2000, scoped, tag = 'input window, operand 1, single buffered']
    #allocation6 [shape = 's32[1]{0}', space=sflag, size = 0x4, scoped, tag = 'scoped memory for tpu_custom_call.1']
    #allocation7 [shape = 'u8[8192]{0}', space=vmem, size = 0x2000, scoped, tag = 'input window, operand 2, single buffered']
    #allocation8 [shape = 'u8[8192]{0}', space=vmem, size = 0x2000, scoped, tag = 'output window, operand 0, single buffered']
    %8 = vsyncpa [#allocation3], 0
    %9 = vsyncpa [#allocation6], 0
    %10 = vsyncpa [#allocation4], 0
    // Predicated region
    $region2: #{tpu_custom_call.1} parent=1 // pred_check
      _
    $region3: #{tpu_custom_call.1} parent=1 // pred_check_branch
      %12 = sbr.rel (0) target = $region5
    $region4: #{tpu_custom_call.1} parent=1 // pred_region
      %14 = vsyncadd [#allocation3], 0
      %s15 = sshll.u32 %s0, 4
      %s16 = int_to_ptr.hbm [resolvable:$true] %s15
      %s17 = sshll.u32 [#allocation2], 4
      %s18 = int_to_ptr.vmem [resolvable:$true] %s17
      %23 = dma.hbm_to_vmem [thread:$0]  %s16, 256, %s18, [#allocation3], 128, 128, 8
    $region5: #{tpu_custom_call.1} parent=1 // pred_fallthru
      _
    // Predicated region
    $region6: #{tpu_custom_call.1} parent=1 // pred_check
      _
    $region7: #{tpu_custom_call.1} parent=1 // pred_check_branch
      %25 = sbr.rel (0) target = $region9
    $region8: #{tpu_custom_call.1} parent=1 // pred_region
      %27 = vsyncadd [#allocation6], 0
      %s28 = sshll.u32 %s1, 4
      %s29 = int_to_ptr.hbm [resolvable:$true] %s28
      %s30 = sshll.u32 [#allocation5], 4
      %s31 = int_to_ptr.vmem [resolvable:$true] %s30
      %36 = dma.hbm_to_vmem [thread:$0]  %s29, 256, %s31, [#allocation6], 128, 128, 8
    $region9: #{tpu_custom_call.1} parent=1 // pred_fallthru
      _
    // Predicated region
    $region10: #{tpu_custom_call.1} parent=1 // pred_check
      _
    $region11: #{tpu_custom_call.1} parent=1 // pred_check_branch
      %38 = sbr.rel (0) target = $region13
    $region12: #{tpu_custom_call.1} parent=1 // pred_region
      %40 = vsyncadd [#allocation6], 0
      %s41 = sshll.u32 %s2, 4
      %s42 = int_to_ptr.hbm [resolvable:$true] %s41
      %s43 = sshll.u32 [#allocation7], 4
      %s44 = int_to_ptr.vmem [resolvable:$true] %s43
      %49 = dma.hbm_to_vmem [thread:$0]  %s42, 256, %s44, [#allocation6], 128, 128, 8
    $region13: #{tpu_custom_call.1} parent=1 // pred_fallthru
      _
    // Predicated region
    $region14: #{tpu_custom_call.1} parent=1 // pred_check
      _
    $region15: #{tpu_custom_call.1} parent=1 // pred_check_branch
      %51 = sbr.rel (0) target = $region17
    $region16: #{tpu_custom_call.1} parent=1 // pred_region
      %53 = dma.done [#allocation3], 256
    $region17: #{tpu_custom_call.1} parent=1 // pred_fallthru
      _
    // Predicated region
    $region18: #{tpu_custom_call.1} parent=1 // pred_check
      _
    $region19: #{tpu_custom_call.1} parent=1 // pred_check_branch
      %55 = sbr.rel (0) target = $region21
    $region20: #{tpu_custom_call.1} parent=1 // pred_region
      %57 = dma.done [#allocation6], 256
    $region21: #{tpu_custom_call.1} parent=1 // pred_fallthru
      _
    // Predicated region
    $region22: #{tpu_custom_call.1} parent=1 // pred_check
      _
    $region23: #{tpu_custom_call.1} parent=1 // pred_check_branch
      %59 = sbr.rel (0) target = $region25
    $region24: #{tpu_custom_call.1} parent=1 // pred_region
      %61 = dma.done [#allocation6], 256
    $region25: #{tpu_custom_call.1} parent=1 // pred_fallthru
      _
    %v62 = vld [vmem:[#allocation2] sm:$0xff]
    %v63 = vld [vmem:[#allocation2 + $0x8] sm:$0xff]
    %v64 = vld [vmem:[#allocation5] sm:$0xff]
    %v65 = vld [vmem:[#allocation5 + $0x8] sm:$0xff]
    %v66 = vld [vmem:[#allocation7] sm:$0xff]
    %v67 = vld [vmem:[#allocation7 + $0x8] sm:$0xff]
    %v68 = vsub.f32 %v66, %v62
    %v69 = vsub.f32 %v67, %v63
    %v70 = vmul.f32 %v64, %v68
    %v71 = vmul.f32 %v65, %v69
    %v72 = vadd.f32 %v62, %v70
    %v73 = vadd.f32 %v63, %v71
    %74 = vst [vmem:[#allocation8] sm:$0xff] %v72
    %75 = vst [vmem:[#allocation8 + $0x8] sm:$0xff] %v73
    // Predicated region
    $region26: #{tpu_custom_call.1} parent=1 // pred_check
      _
    $region27: #{tpu_custom_call.1} parent=1 // pred_check_branch
      %77 = sbr.rel (0) target = $region29
    $region28: #{tpu_custom_call.1} parent=1 // pred_region
      %79 = vsyncadd [#allocation4], 0
      %s80 = sshll.u32 [#allocation8], 4
      %s81 = int_to_ptr.vmem [resolvable:$true] %s80
      %s82 = sshll.u32 %s3, 4
      %s83 = int_to_ptr.hbm [resolvable:$true] %s82
      %88 = dma.vmem_to_hbm [thread:$0]  %s81, 256, %s83, [#allocation4], 128, 128, 8
    $region29: #{tpu_custom_call.1} parent=1 // pred_fallthru
      _
    // Predicated region
    $region30: #{tpu_custom_call.1} parent=1 // pred_check
      _
    $region31: #{tpu_custom_call.1} parent=1 // pred_check_branch
      %90 = sbr.rel (0) target = $region33
    $region32: #{tpu_custom_call.1} parent=1 // pred_region
      %92 = dma.done [#allocation4], 256
    $region33: #{tpu_custom_call.1} parent=1 // pred_fallthru
      _
    %93 = vsyncpa [#allocation3], 1
    %94 = vsyncpa [#allocation6], 1
    %95 = vsyncpa [#allocation4], 1

</llo_original>
